<compile_context>
chip_gen: v6e
topology: v6e:2x2x1
jax: 0.10.0
libtpu: 0.0.40
codegen_flags: <defaults>
</compile_context>

<pallas_src>
import jax
import jax.numpy as jnp
import numpy as np
from jax.experimental import pallas as pl
from jax.experimental.pallas import tpu as pltpu

# Lane-dense tile width used once theta no longer fits in one VMEM block.
# Multiple of 128 -> unmasked vst; 64K f32 lanes = 256 KiB per block, so
# double-buffered in+out tiles stay far under every generation's VMEM.
_LANE_TILE = 64 * 1024

# Conservative single-block budget (bytes): fits v7x's 32 MiB default scoped
# VMEM (64 MiB physical) with headroom, and trivially fits v5e/v6e's 128 MiB.
_SINGLE_BLOCK_BYTES = 8 * 1024 * 1024


def theta_forward_kernel(theta_ref, out_ref):
    # forward(): return self.theta  -> identity read of the parameter block.
    out_ref[...] = theta_ref[...]


def _theta_forward_2d(theta_2d: jax.Array) -> jax.Array:
    """Identity forward on a lane-dense (1, d) parameter slab."""
    _, d = theta_2d.shape
    nbytes = d * theta_2d.dtype.itemsize
    # With aliasing in effect this is effectively one read stream.
    cost = pl.CostEstimate(flops=0, transcendentals=0, bytes_accessed=nbytes)

    if nbytes <= _SINGLE_BLOCK_BYTES:
        # Small theta: no grid — a 1-point grid would only add loop/index_map/
        # DMA bookkeeping. Whole array is a single VMEM-resident block.
        return pl.pallas_call(
            theta_forward_kernel,
            out_shape=jax.ShapeDtypeStruct((1, d), theta_2d.dtype),
            in_specs=[pl.BlockSpec(memory_space=pltpu.MemorySpace.VMEM)],
            out_specs=pl.BlockSpec(memory_space=pltpu.MemorySpace.VMEM),
            input_output_aliases={0: 0},
            cost_estimate=cost,
        )(theta_2d)

    # Large theta: 1-D grid of lane-dense tiles so each block (and its double
    # buffering) fits v7x's smaller VMEM without raising vmem_limit_bytes.
    grid = (pl.cdiv(d, _LANE_TILE),)
    return pl.pallas_call(
        theta_forward_kernel,
        out_shape=jax.ShapeDtypeStruct((1, d), theta_2d.dtype),
        grid=grid,
        in_specs=[pl.BlockSpec((1, _LANE_TILE), lambda i: (0, i))],
        out_specs=pl.BlockSpec((1, _LANE_TILE), lambda i: (0, i)),
        input_output_aliases={0: 0},
        cost_estimate=cost,
        compiler_params=pltpu.CompilerParams(
            dimension_semantics=("parallel",)),
    )(theta_2d)


# Donation makes input_output_aliases={0: 0} actually alias the HBM buffer
# (no defensive copy before the custom call, no separate write-back).
theta_forward = jax.jit(_theta_forward_2d, donate_argnums=(0,))


def init_theta(key: jax.Array, d: int, init_range=(-5.0, 5.0),
               dtype=jnp.float32) -> jax.Array:
    """nn.init.uniform_(theta, -5.0, 5.0) equivalent; stored lane-dense as (1, d)."""
    lo, hi = init_range
    return jax.random.uniform(key, (1, d), dtype=dtype, minval=lo, maxval=hi)


if __name__ == "__main__":
    d = 32
    key = jax.random.PRNGKey(0)
    theta = init_theta(key, d)

    # Host copy for verification — the device buffer is donated below.
    theta_host = np.asarray(theta)

    out_2d = theta_forward(theta)
    out_2d = jax.block_until_ready(out_2d)

    # PyTorch forward() returns shape (d,); reshape once, outside the hot path.
    out = out_2d.reshape(d)

    assert out.shape == (d,)
    assert out.dtype == jnp.float32
    assert np.allclose(np.asarray(out), theta_host.reshape(d)), (
        "forward() must return theta exactly")
    assert float(theta_host.min()) >= -5.0 and float(theta_host.max()) <= 5.0

    print("KERNEL_OK")
</pallas_src>

<mosaic_0001>
module attributes {stable_mosaic.version = 11 : i64} {
  func.func @theta_forward_kernel(%arg0: memref<1x32xf32, #tpu.memory_space<vmem>>, %arg1: memref<1x32xf32, #tpu.memory_space<vmem>>) attributes {dimension_semantics = [], scalar_prefetch = 0 : i64, scratch_operands = 0 : i64, tpu.core_type = #tpu.core_type<tc>} {
    %c0 = arith.constant 0 : index
    %c0_0 = arith.constant 0 : index
    %0 = vector.load %arg0[%c0, %c0_0] : memref<1x32xf32, #tpu.memory_space<vmem>>, vector<1x32xf32>
    %c0_1 = arith.constant 0 : index
    %c0_2 = arith.constant 0 : index
    %1 = vector.load %arg1[%c0_1, %c0_2] : memref<1x32xf32, #tpu.memory_space<vmem>>, vector<1x32xf32>
    tpu.vector_store %arg1[%c0_1, %c0_2], %0 {strides = array<i32>} : memref<1x32xf32, #tpu.memory_space<vmem>>, vector<1x32xf32>,
    return
  }
}

</mosaic_0001>

<llo_original>
// kernel: _theta_forward_2d.1
$region0: #{_theta_forward_2d.1}
  #allocation0 [shape = 'u32[]', space=smem, size = 0x4, offset = 0x4, fixed_abs, tag = 'smem constant byte address 0x4 - core index']
  #allocation1 [shape = 'u32[144,128]{1,0:T(1,128)}', space=vmem, size = 0x12000, scoped, tag = 'internal scratch']
  %s0 = inlined_call_operand.hbm [shape: f32[1,32], index: 0, kind: input, shape index: {}, may-alias: {0,1}]
  %s1 = inlined_call_operand.hbm [shape: f32[1,32], index: 1, kind: output, shape index: {}, may-alias: {0,1}]
  %s2 = sld [smem:[#allocation0]]
  $region18: #{_theta_forward_2d.1} parent=0
    _
  %s4 = ssub.s32 1, %s2
  %s5 = scalar_select 0, %s4, %s2
  $region1: #{_theta_forward_2d.1} parent=0
    #allocation2 [shape = 'u8[512]{0}', space=vmem, size = 0x400, scoped, tag = 'input window, operand 0, single buffered']
    #allocation3 [shape = 's32[1]{0}', space=sflag, size = 0x4, scoped, tag = 'scoped memory for _theta_forward_2d.1']
    #allocation4 [shape = 's32[1]{0}', space=sflag, size = 0x4, scoped, tag = 'scoped memory for _theta_forward_2d.1']
    #allocation5 [shape = 'u8[512]{0}', space=vmem, size = 0x400, scoped, tag = 'output window, operand 0, single buffered']
    %6 = vsyncpa [#allocation3], 0
    %7 = vsyncpa [#allocation4], 0
    // Predicated region
    $region2: #{_theta_forward_2d.1} parent=1 // pred_check
      _
    $region3: #{_theta_forward_2d.1} parent=1 // pred_check_branch
      %9 = sbr.rel (0) target = $region5
    $region4: #{_theta_forward_2d.1} parent=1 // pred_region
      %s11 = ssub.s32 16, 16
      %12 = vsyncadd [#allocation3], %s11
      %s14 = sshll.u32 [#allocation2], 4
      %s15 = int_to_ptr.vmem [resolvable:$true] %s14
      %17 = dma.hbm_to_vmem [thread:$0]  %s0, 16, %s15, [#allocation3]
    $region5: #{_theta_forward_2d.1} parent=1 // pred_fallthru
      _
    // Predicated region
    $region6: #{_theta_forward_2d.1} parent=1 // pred_check
      _
    $region7: #{_theta_forward_2d.1} parent=1 // pred_check_branch
      %19 = sbr.rel (0) target = $region9
    $region8: #{_theta_forward_2d.1} parent=1 // pred_region
      %20 = dma.done [#allocation3], 16
    $region9: #{_theta_forward_2d.1} parent=1 // pred_fallthru
      _
    %v21 = vld [vmem:[#allocation2] sm:$0x1]
    %vm22 = vcmask 253952
    %23 = vst.msk [vmem:[#allocation5] sm:$0x1] %vm22, %v21
    // Predicated region
    $region10: #{_theta_forward_2d.1} parent=1 // pred_check
      _
    $region11: #{_theta_forward_2d.1} parent=1 // pred_check_branch
      %25 = sbr.rel (0) target = $region13
    $region12: #{_theta_forward_2d.1} parent=1 // pred_region
      %s27 = ssub.s32 16, 16
      %28 = vsyncadd [#allocation4], %s27
      %s30 = sshll.u32 [#allocation5], 4
      %s31 = int_to_ptr.vmem [resolvable:$true] %s30
      %33 = dma.vmem_to_hbm [thread:$0]  %s31, 16, %s1, [#allocation4]
    $region13: #{_theta_forward_2d.1} parent=1 // pred_fallthru
      _
    // Predicated region
    $region14: #{_theta_forward_2d.1} parent=1 // pred_check
      _
    $region15: #{_theta_forward_2d.1} parent=1 // pred_check_branch
      %35 = sbr.rel (0) target = $region17
    $region16: #{_theta_forward_2d.1} parent=1 // pred_region
      %36 = dma.done [#allocation4], 16
    $region17: #{_theta_forward_2d.1} parent=1 // pred_fallthru
      _
    %37 = vsyncpa [#allocation3], 1
    %38 = vsyncpa [#allocation4], 1

</llo_original>
